<compile_context>
chip_gen: v7x
topology: tpu7x:2x2x1
jax: 0.10.0
libtpu: 0.0.40
codegen_flags: <defaults>
</compile_context>

<pallas_src>
import functools

import numpy as np
import jax
import jax.numpy as jnp
from jax import lax
from jax.experimental import pallas as pl
from jax.experimental.pallas import tpu as pltpu


# ------------------------- fused Pallas kernel -------------------------

def _bf_cnn_rf_kernel(x_ref, w3_ref, w1_ref, g_ref, o_ref, *,
                      H, W, C, plan, roll_like_jnp, concat_im2col):
    """Whole BF_CNN_RF forward on one TensorCore; activation stays in VMEM/vregs.

    x_ref  : (M, C)   input, NHWC rows flattened n-major/h/w, channels padded to C
    w3_ref : (n3, 9*C, C) bf16 im2col 3x3 weights (first & last layers padded)
    w1_ref : (n1, C, C)   bf16 1x1 middle-layer weights
    g_ref  : (19, C)  f32 BN gammas
    o_ref  : (M, C)   f32 output (last-layer Cout zero-padded to C)
    """
    M = o_ref.shape[0]
    f32, bf16 = jnp.float32, jnp.bfloat16

    # Hoisted boundary masks, shared by all 3x3 layers (zero-padding semantics).
    row = lax.broadcasted_iota(jnp.int32, (M, 1), 0)
    w_idx = row % W
    h_idx = (row // W) % H
    edge = {(-1, 0): h_idx > 0, (1, 0): h_idx < H - 1,
            (0, -1): w_idx > 0, (0, 1): w_idx < W - 1}

    def tap(act, dh, dw):
        """tap[r] = act[r + dh*W + dw], zeroed where the source pixel is OOB."""
        s = dh * W + dw
        if s == 0:
            t = act
        else:
            shift = (-s) % M if roll_like_jnp else s % M
            t = pltpu.roll(act, shift=shift, axis=0)        # XLU sublane rotate
        m = None
        if dh != 0:
            m = edge[(dh, 0)]
        if dw != 0:
            m = edge[(0, dw)] if m is None else jnp.logical_and(m, edge[(0, dw)])
        if m is not None:
            t = jnp.where(m, t, 0.0)
        return t

    def conv3x3(act, wi):
        taps = [tap(act, dh, dw) for dh in (-1, 0, 1) for dw in (-1, 0, 1)]
        if concat_im2col:
            # In-register im2col: (M, 9*C) patch value, one K=288 MXU matmul.
            patch = jnp.concatenate(taps, axis=1).astype(bf16)
            return jnp.dot(patch, w3_ref[wi], preferred_element_type=f32)
        # Fallback: per-tap K=32 matmuls accumulated in f32 (identical math).
        y = jnp.zeros((M, C), f32)
        for ti, t in enumerate(taps):
            y = y + jnp.dot(t.astype(bf16), w3_ref[wi, ti * C:(ti + 1) * C, :],
                            preferred_element_type=f32)
        return y

    def bn_relu(y, li):
        # Bias-free BN (training-mode batch stats over N,H,W == axis 0), single
        # pass: var = E[y^2] - mu^2 in f32 (conv output ~zero-mean, safe).
        s1 = jnp.sum(y, axis=0, keepdims=True)
        s2 = jnp.sum(y * y, axis=0, keepdims=True)
        mu = s1 * (1.0 / M)
        var = s2 * (1.0 / M) - mu * mu
        scale = g_ref[li:li + 1, :] * lax.rsqrt(var + 1e-5)   # (1, C), EUP rsqrt
        return jnp.maximum(y * scale, 0.0)

    # layer 0: 3x3, (padded) Cin -> C, no BN/ReLU
    act = conv3x3(x_ref[...], 0)

    # layers 1..19: conv + BN + ReLU, activation resident the whole time
    i3, i1 = 1, 0
    for li, is3 in enumerate(plan):
        if is3:
            y = conv3x3(act, i3)
            i3 += 1
        else:
            y = jnp.dot(act.astype(bf16), w1_ref[i1], preferred_element_type=f32)
            i1 += 1
        act = bn_relu(y, li)

    # last layer: 3x3, C -> C (output channels zero-padded); single full store
    o_ref[...] = conv3x3(act, i3)


# ------------------------- wrapper -------------------------

def _pack_params(params):
    """Pack per-layer weights into stacked, kernel-friendly bf16 arrays."""
    convs, gammas = params["convs"], params["gammas"]
    num_layers = params["num_layers"]

    w_first, _ = convs[0]
    KH, _, Cin, C = w_first.shape
    w_last, _ = convs[-1]
    Cout = w_last.shape[-1]
    K9 = KH * KH * C

    # First layer: zero-pad input channels Cin -> C; last layer: zero-pad
    # output channels Cout -> C, so all 3x3 layers share one (K9, C) shape.
    w3_list = [jnp.pad(w_first, ((0, 0), (0, 0), (0, C - Cin), (0, 0)))]
    w1_list, plan = [], []
    for l in range(1, num_layers - 1):
        w, _ = convs[l]
        if w.shape[0] == 1:
            plan.append(False)
            w1_list.append(w.reshape(C, C))
        else:
            plan.append(True)
            w3_list.append(w)
    w3_list.append(jnp.pad(w_last, ((0, 0), (0, 0), (0, 0), (0, C - Cout))))

    w3 = jnp.stack([w.reshape(K9, C) for w in w3_list]).astype(jnp.bfloat16)
    w1 = (jnp.stack(w1_list) if w1_list
          else jnp.zeros((1, C, C), jnp.float32)).astype(jnp.bfloat16)
    g = jnp.stack(gammas)                                        # (19, C) f32
    return w3, w1, g, tuple(plan), (KH, Cin, C, Cout)


def bf_cnn_rf_forward(x_nchw, params, *, roll_like_jnp=True, concat_im2col=True):
    """Pallas forward pass.  Input/output are NCHW, matching PyTorch."""
    w3, w1, g, plan, (KH, Cin, C, Cout) = _pack_params(params)
    N, Cx, H, W = x_nchw.shape
    assert Cx == Cin and KH == 3
    M = N * H * W

    x = jnp.transpose(x_nchw, (0, 2, 3, 1)).astype(jnp.float32)   # NCHW -> NHWC
    x = jnp.pad(x, ((0, 0), (0, 0), (0, 0), (0, C - Cin)))        # channels -> C
    x2d = x.reshape(M, C)

    kern = functools.partial(_bf_cnn_rf_kernel, H=H, W=W, C=C, plan=plan,
                             roll_like_jnp=roll_like_jnp,
                             concat_im2col=concat_im2col)
    vmem = pl.BlockSpec(memory_space=pltpu.MemorySpace.VMEM)
    out2d = pl.pallas_call(
        kern,
        out_shape=jax.ShapeDtypeStruct((M, C), jnp.float32),
        in_specs=[vmem] * 4,
        out_specs=vmem,
    )(x2d, w3, w1, g)

    out = out2d[:, :Cout].reshape(N, H, W, Cout)
    return jnp.transpose(out, (0, 3, 1, 2))                       # NHWC -> NCHW


def _pltpu_roll_matches_jnp():
    """One-time device probe of pltpu.roll direction (result[i] == x[i-shift])."""
    def k(x_ref, o_ref):
        o_ref[...] = pltpu.roll(x_ref[...], shift=1, axis=0)
    x = jnp.arange(8 * 128, dtype=jnp.float32).reshape(8, 128)
    y = pl.pallas_call(k, out_shape=jax.ShapeDtypeStruct((8, 128), jnp.float32))(x)
    return bool(jnp.allclose(y, jnp.roll(x, 1, axis=0)))


# ------------------------- model construction -------------------------

def make_params(key, *, num_layers=21, RF=13, num_channels=4, num_kernels=32,
                kernel_size=3, padding=1, coarse=True):
    """Deterministic synthetic parameters mirroring BF_CNN_RF.__init__ shapes."""
    assert num_layers == 21
    assert RF in [5, 8, 9, 13, 23, 43]
    if RF == 9:
        RF = 8
    divisor = (num_layers - 1) / ((RF - 1) / 2 - 1)

    in0 = num_channels if coarse else num_channels * 3 + 1
    out_last = num_channels if coarse else num_channels * 3

    convs = []   # list of (weight_HWIO, padding)
    gammas = []  # 19 gamma vectors, one per BN layer

    def conv_w(k, cin, cout, ksz):
        std = np.sqrt(2.0 / (cin * ksz * ksz)).astype(np.float32)
        return jax.random.normal(k, (ksz, ksz, cin, cout), jnp.float32) * std

    keys = jax.random.split(key, num_layers + (num_layers - 2))
    ki = 0
    convs.append((conv_w(keys[ki], in0, num_kernels, kernel_size), padding)); ki += 1
    for l in range(1, num_layers - 1):
        if l % divisor != 0:
            ksz, pad = 1, 0
        else:
            ksz, pad = kernel_size, padding
        convs.append((conv_w(keys[ki], num_kernels, num_kernels, ksz), pad)); ki += 1
        gm = jax.random.normal(keys[ki], (num_kernels,), jnp.float32) * (2.0 / 9.0 / 64.0)
        gammas.append(jnp.clip(gm, -0.025, 0.025)); ki += 1
    convs.append((conv_w(keys[ki], num_kernels, out_last, kernel_size), padding)); ki += 1

    return {"convs": convs, "gammas": gammas, "num_layers": num_layers}


# ------------------------- pure-JAX reference -------------------------

def ref_forward(x_nchw, params):
    def conv(x, w_hwio, pad):
        return lax.conv_general_dilated(
            x, w_hwio, (1, 1), [(pad, pad), (pad, pad)],
            dimension_numbers=("NCHW", "HWIO", "NCHW"),
            precision=lax.Precision.HIGHEST)

    num_layers = params["num_layers"]
    convs, gammas = params["convs"], params["gammas"]
    x = x_nchw.astype(jnp.float32)
    w, pad = convs[0]
    x = conv(x, w, pad)
    for l in range(1, num_layers - 1):
        w, pad = convs[l]
        x = conv(x, w, pad)
        sd = jnp.sqrt(jnp.var(x, axis=(0, 2, 3), keepdims=True) + 1e-5)
        x = x / sd * gammas[l - 1].reshape(1, -1, 1, 1)
        x = jnp.maximum(x, 0.0)
    w, pad = convs[-1]
    return conv(x, w, pad)


# ------------------------- main -------------------------

if __name__ == "__main__":
    key = jax.random.PRNGKey(0)
    k_param, k_x = jax.random.split(key)

    params = make_params(k_param, num_layers=21, RF=13, num_channels=4,
                         num_kernels=32, kernel_size=3, padding=1, coarse=True)
    x = jax.random.normal(k_x, (2, 4, 16, 16), jnp.float32)       # NCHW

    roll_ok = _pltpu_roll_matches_jnp()

    def run(concat):
        fn = jax.jit(functools.partial(bf_cnn_rf_forward, params=params,
                                       roll_like_jnp=roll_ok,
                                       concat_im2col=concat))
        return jax.block_until_ready(fn(x))

    try:
        out = run(True)       # preferred: one K=288 bf16 MXU matmul per 3x3 layer
    except Exception:         # Mosaic build without unaligned lane concat:
        out = run(False)      # per-tap K=32 matmul-accumulate, same math
    assert out.shape == (2, 4, 16, 16)

    ref = jax.block_until_ready(ref_forward(x, params))
    # atol headroom for bf16 MXU operands over 21 layers (f32 accumulation).
    np.testing.assert_allclose(np.asarray(out), np.asarray(ref),
                               rtol=2e-2, atol=2e-3)

    print("KERNEL_OK")
</pallas_src>

<mosaic_0001>
module attributes {stable_mosaic.version = 11 : i64} {
  func.func @k(%arg0: memref<8x128xf32, #tpu.memory_space<vmem>>, %arg1: memref<8x128xf32, #tpu.memory_space<vmem>>) attributes {dimension_semantics = [], scalar_prefetch = 0 : i64, scratch_operands = 0 : i64, tpu.core_type = #tpu.core_type<tc>} {
    %c0 = arith.constant 0 : index
    %c0_0 = arith.constant 0 : index
    %0 = vector.load %arg0[%c0, %c0_0] : memref<8x128xf32, #tpu.memory_space<vmem>>, vector<8x128xf32>
    %c1_i32 = arith.constant 1 : i32
    %1 = tpu.dynamic_rotate %0 by %c1_i32 dim 0 : vector<8x128xf32>, i32 -> vector<8x128xf32>
    %c0_1 = arith.constant 0 : index
    %c0_2 = arith.constant 0 : index
    %2 = vector.load %arg1[%c0_1, %c0_2] : memref<8x128xf32, #tpu.memory_space<vmem>>, vector<8x128xf32>
    tpu.vector_store %arg1[%c0_1, %c0_2], %1 {strides = array<i32>} : memref<8x128xf32, #tpu.memory_space<vmem>>, vector<8x128xf32>,
    return
  }
}

</mosaic_0001>

<llo_original>
// kernel: tpu_custom_call.1
$region0: #{tpu_custom_call.1}
  #allocation0 [shape = 'u32[]', space=smem, size = 0x4, offset = 0x4, fixed_abs, tag = 'smem constant byte address 0x4 - core index']
  #allocation1 [shape = 'u32[144,128]{1,0:T(1,128)}', space=vmem, size = 0x12000, scoped, tag = 'internal scratch']
  %s0 = inlined_call_operand.hbm [shape: f32[8,128], index: 0, kind: input, shape index: {}]
  %s1 = inlined_call_operand.hbm [shape: f32[8,128], index: 1, kind: output, shape index: {}]
  %s2 = sld [smem:[#allocation0]]
  $region18: #{tpu_custom_call.1} parent=0
    _
  %s4 = ssub.s32 1, %s2
  %s5 = scalar_select 0, %s4, %s2
  $region1: #{tpu_custom_call.1} parent=0
    #allocation2 [shape = 'u8[4096]{0}', space=vmem, size = 0x1000, scoped, tag = 'input window, operand 0, single buffered']
    #allocation3 [shape = 's32[1]{0}', space=sflag, size = 0x4, scoped, tag = 'scoped memory for tpu_custom_call.1']
    #allocation4 [shape = 's32[1]{0}', space=sflag, size = 0x4, scoped, tag = 'scoped memory for tpu_custom_call.1']
    #allocation5 [shape = 'u8[4096]{0}', space=vmem, size = 0x1000, scoped, tag = 'output window, operand 0, single buffered']
    %6 = vsyncpa [#allocation3], 0
    %7 = vsyncpa [#allocation4], 0
    // Predicated region
    $region2: #{tpu_custom_call.1} parent=1 // pred_check
      _
    $region3: #{tpu_custom_call.1} parent=1 // pred_check_branch
      %9 = sbr.rel (0) target = $region5
    $region4: #{tpu_custom_call.1} parent=1 // pred_region
      %s11 = ssub.s32 128, 128
      %12 = vsyncadd [#allocation3], %s11
      %s14 = sshll.u32 [#allocation2], 4
      %s15 = int_to_ptr.vmem [resolvable:$true] %s14
      %17 = dma.hbm_to_vmem [thread:$0]  %s0, 128, %s15, [#allocation3]
    $region5: #{tpu_custom_call.1} parent=1 // pred_fallthru
      _
    // Predicated region
    $region6: #{tpu_custom_call.1} parent=1 // pred_check
      _
    $region7: #{tpu_custom_call.1} parent=1 // pred_check_branch
      %19 = sbr.rel (0) target = $region9
    $region8: #{tpu_custom_call.1} parent=1 // pred_region
      %20 = dma.done [#allocation3], 128
    $region9: #{tpu_custom_call.1} parent=1 // pred_fallthru
      _
    %v21 = vld [vmem:[#allocation2] sm:$0xff]
    %v22 = vrot.slane %v21, 7
    %23 = vst [vmem:[#allocation5] sm:$0xff] %v22
    // Predicated region
    $region10: #{tpu_custom_call.1} parent=1 // pred_check
      _
    $region11: #{tpu_custom_call.1} parent=1 // pred_check_branch
      %25 = sbr.rel (0) target = $region13
    $region12: #{tpu_custom_call.1} parent=1 // pred_region
      %s27 = ssub.s32 128, 128
      %28 = vsyncadd [#allocation4], %s27
      %s30 = sshll.u32 [#allocation5], 4
      %s31 = int_to_ptr.vmem [resolvable:$true] %s30
      %33 = dma.vmem_to_hbm [thread:$0]  %s31, 128, %s1, [#allocation4]
    $region13: #{tpu_custom_call.1} parent=1 // pred_fallthru
      _
    // Predicated region
    $region14: #{tpu_custom_call.1} parent=1 // pred_check
      _
    $region15: #{tpu_custom_call.1} parent=1 // pred_check_branch
      %35 = sbr.rel (0) target = $region17
    $region16: #{tpu_custom_call.1} parent=1 // pred_region
      %36 = dma.done [#allocation4], 128
    $region17: #{tpu_custom_call.1} parent=1 // pred_fallthru
      _
    %37 = vsyncpa [#allocation3], 1
    %38 = vsyncpa [#allocation4], 1

</llo_original>
